<compile_context>
chip_gen: v7x
topology: tpu7x:2x2x1
jax: 0.10.0
libtpu: 0.0.40
codegen_flags: <defaults>
</compile_context>

<pallas_src>
import functools

import jax
import jax.numpy as jnp
from jax import lax
from jax.experimental import pallas as pl
from jax.experimental.pallas import tpu as pltpu

GLOVE_DIM = 300
PROJECTION_DIM = 300
PARAM_STD = 0.01

LANE = 128
SUBLANE = 8


def _round_up(x, m):
    return ((x + m - 1) // m) * m


# ----------------------------------------------------------------- fused gather+project
def gather_project_kernel(idx_ref, w_ref, e_tab, out_ref, rows, sems, *,
                          tm, window, table_in_vmem):
    # idx_ref : (M_pad,)        int32 in SMEM (scalar-prefetched token ids)
    # w_ref   : (P_pad, D_pad)  bf16 VMEM-resident projection weight, torch (out, in) layout
    # e_tab   : (V_pad, D_pad)  f32 embedding table; VMEM-resident or HBM (pl.ANY)
    # out_ref : (tm, P_pad)     f32 output tile (lane-dense, 384 = 3*128 -> unmasked vst)
    # rows    : (tm, D_pad)     f32 VMEM landing buffer for the gathered embedding rows
    # sems    : (window,)       per-slot DMA semaphores for the rolling gather window
    base = pl.program_id(0) * tm

    if table_in_vmem:
        # Table lives in VMEM: gather with cheap dynamic sublane loads (a few cycles per
        # row) instead of microsecond-class DMA issue + latency.
        @pl.loop(0, tm)
        def _(j):
            tok = idx_ref[base + j]
            rows[pl.ds(j, 1), :] = e_tab[pl.ds(tok, 1), :]
    else:
        # Table stays in HBM: bounded rolling window of outstanding per-row DMAs.
        def row_copy(j):
            tok = idx_ref[base + j]
            return pltpu.make_async_copy(e_tab.at[pl.ds(tok, 1), :],
                                         rows.at[pl.ds(j, 1), :],
                                         sems.at[j % window])

        # Prime the window.
        @pl.loop(0, min(window, tm))
        def _(j):
            row_copy(j).start()

        # Wait copy j (real descriptor, per-slot semaphore), refill its slot with j+window.
        @pl.loop(0, tm)
        def _(j):
            row_copy(j).wait()

            @pl.when(j + window < tm)
            def _():
                row_copy(j + window).start()

    # Project: out[m, p] = sum_d rows[m, d] * W[p, d]  — contract the torch-layout weight
    # on its last dim (implicit W^T), bf16 operands, f32 accumulation on the MXU.
    out_ref[...] = lax.dot_general(
        rows[...].astype(jnp.bfloat16), w_ref[...],
        dimension_numbers=(((1,), (1,)), ((), ())),
        preferred_element_type=jnp.float32)


def _gather_project(idx_pad, e_pad, w_pad, *, tm, window, table_in_vmem):
    M_pad = idx_pad.shape[0]
    V_pad, D_pad = e_pad.shape
    P_pad = w_pad.shape[0]

    if table_in_vmem:
        # Whole padded table is DMA'd into VMEM once (constant index map -> no re-fetch).
        table_spec = pl.BlockSpec((V_pad, D_pad), lambda i, idx: (0, 0))
    else:
        # Table stays in HBM; rows are gathered on demand inside the kernel.
        table_spec = pl.BlockSpec(memory_space=pl.ANY)

    return pl.pallas_call(
        functools.partial(gather_project_kernel, tm=tm, window=window,
                          table_in_vmem=table_in_vmem),
        out_shape=jax.ShapeDtypeStruct((M_pad, P_pad), jnp.float32),
        grid_spec=pltpu.PrefetchScalarGridSpec(
            num_scalar_prefetch=1,                               # token ids -> SMEM
            grid=(M_pad // tm,),
            in_specs=[
                pl.BlockSpec((P_pad, D_pad), lambda i, idx: (0, 0)),  # weight, resident
                table_spec,
            ],
            out_specs=pl.BlockSpec((tm, P_pad), lambda i, idx: (i, 0)),
            scratch_shapes=[pltpu.VMEM((tm, D_pad), jnp.float32),
                            pltpu.SemaphoreType.DMA((window,))],
        ),
        compiler_params=pltpu.CompilerParams(
            dimension_semantics=("parallel",)),
    )(idx_pad, w_pad, e_pad)


# ----------------------------------------------------------------------------- wrapper
def make_projection_net(init_embed, proj_weight, *, tm=256, window=16,
                        table_in_vmem=None, vmem_table_budget=16 << 20):
    """Build the ProjectionNet forward pass.

    init_embed : (words_count, GLOVE_DIM) f32  — nn.Embedding weight.
    proj_weight: (PROJECTION_DIM, GLOVE_DIM) f32 — torch nn.Linear layout (out, in).
    Returns forward(x: (B, S) int) -> (B, S, PROJECTION_DIM) f32.

    Padding / casting of the parameters happens ONCE here (hoisted out of the per-call
    path).  tm=256 targets v6e/v7x; pass tm=128 on v5e.  The VMEM-resident-table cutoff
    (vmem_table_budget) is sized for v7x's 64 MiB VMEM; it can be ~2x larger on v5e/v6e.
    """
    V, D = init_embed.shape
    P, D2 = proj_weight.shape
    assert D == D2 == GLOVE_DIM and P == PROJECTION_DIM

    D_pad = _round_up(D, LANE)            # 300 -> 384 : lane-dense contraction dim
    P_pad = _round_up(P, LANE)            # 300 -> 384 : lane-dense output stores
    V_pad = _round_up(V, SUBLANE)

    # One-time layout glue.  Zero-padding the weight's contraction dim means any padding
    # columns of a gathered row are annihilated in the matmul.
    e_pad = jnp.zeros((V_pad, D_pad), jnp.float32).at[:V, :D].set(
        init_embed.astype(jnp.float32))
    w_pad = jnp.zeros((P_pad, D_pad), jnp.bfloat16).at[:P, :D].set(
        proj_weight.astype(jnp.bfloat16))

    if table_in_vmem is None:
        # Keep the table VMEM-resident when it fits (double-buffered) in the budget.
        table_in_vmem = 2 * V_pad * D_pad * 4 <= vmem_table_budget

    def forward(x):
        B, S = x.shape
        M = B * S
        tm_eff = min(tm, _round_up(M, SUBLANE))   # clamp tile for small batches
        M_pad = _round_up(M, tm_eff)

        # Clip token ids for memory safety (nn.Embedding would raise instead).
        idx = jnp.clip(x.reshape(M).astype(jnp.int32), 0, V - 1)
        idx_pad = jnp.zeros((M_pad,), jnp.int32).at[:M].set(idx)

        out = _gather_project(idx_pad, e_pad, w_pad, tm=tm_eff,
                              window=window, table_in_vmem=table_in_vmem)
        return out[:M, :P].reshape(B, S, P)

    return jax.jit(forward)


if __name__ == "__main__":
    # Small, deterministic setup consistent with the module's __init__.
    B, S = 2, 8            # batch=2, seq=8 -> M = 16 token rows
    words_count = 64       # vocabulary size

    key = jax.random.PRNGKey(0)
    k_embed, k_proj, k_idx = jax.random.split(key, 3)

    init_embed = jax.random.normal(k_embed, (words_count, GLOVE_DIM), dtype=jnp.float32)
    proj_weight = PARAM_STD * jax.random.normal(
        k_proj, (PROJECTION_DIM, GLOVE_DIM), dtype=jnp.float32)
    x = jax.random.randint(k_idx, (B, S), 0, words_count, dtype=jnp.int32)

    # Pure-JAX reference of the PyTorch forward pass (f32).
    ref = (init_embed[x.reshape(-1)] @ proj_weight.T).reshape(B, S, PROJECTION_DIM)

    # Exercise both table placements: VMEM-resident (small vocab) and
    # HBM + rolling-window row DMAs (large vocab path).
    for resident in (True, False):
        fwd = make_projection_net(init_embed, proj_weight, table_in_vmem=resident)
        out = jax.block_until_ready(fwd(x))
        assert out.shape == (B, S, PROJECTION_DIM)
        assert jnp.allclose(out, ref, atol=1e-2, rtol=1e-2), (
            resident, float(jnp.max(jnp.abs(out - ref))))

    print("KERNEL_OK")
</pallas_src>

<mosaic_0001>
module attributes {stable_mosaic.version = 11 : i64} {
  func.func @gather_project_kernel(%arg0: i32, %arg1: memref<16xi32, #tpu.memory_space<smem>>, %arg2: memref<384x384xbf16, #tpu.memory_space<vmem>>, %arg3: memref<64x384xf32, #tpu.memory_space<vmem>>, %arg4: memref<16x384xf32, #tpu.memory_space<vmem>>, %arg5: memref<16x384xf32, #tpu.memory_space<vmem>>, %arg6: memref<16x!tpu.dma_semaphore, #tpu.memory_space<semaphore_mem>>) attributes {dimension_semantics = [#tpu.dimension_semantics<parallel>], iteration_bounds = array<i64: 1>, scalar_prefetch = 1 : i64, scratch_operands = 2 : i64, tpu.core_type = #tpu.core_type<tc>, window_params = [{pipeline_mode = #tpu.pipeline_mode<synchronous>, transform_indices = @transform_0, window_bounds = array<i64: 384, 384>}, {pipeline_mode = #tpu.pipeline_mode<synchronous>, transform_indices = @transform_1, window_bounds = array<i64: 64, 384>}, {transform_indices = @transform_2, window_bounds = array<i64: 16, 384>}]} {
    %c16_i32 = arith.constant 16 : i32
    %0 = arith.muli %arg0, %c16_i32 : i32
    %c0_i32 = arith.constant 0 : i32
    %c16_i32_0 = arith.constant 16 : i32
    %1 = arith.addi %c0_i32, %c16_i32_0 : i32
    %c1_i32 = arith.constant 1 : i32
    scf.for %arg7 = %c0_i32 to %1 step %c1_i32  : i32 {
      %c1_i32_7 = arith.constant 1 : i32
      %7 = arith.muli %arg7, %c1_i32_7 : i32
      %c0_i32_8 = arith.constant 0 : i32
      %8 = arith.addi %c0_i32_8, %7 : i32
      %9 = arith.addi %0, %8 : i32
      %10 = arith.index_cast %9 : i32 to index
      %11 = memref.load %arg1[%10] : memref<16xi32, #tpu.memory_space<smem>>
      %12 = arith.index_cast %11 : i32 to index
      %c0_9 = arith.constant 0 : index
      %13 = vector.load %arg3[%12, %c0_9] : memref<64x384xf32, #tpu.memory_space<vmem>>, vector<1x384xf32>
      %14 = arith.index_cast %8 : i32 to index
      %c0_10 = arith.constant 0 : index
      %15 = vector.load %arg5[%14, %c0_10] : memref<16x384xf32, #tpu.memory_space<vmem>>, vector<1x384xf32>
      tpu.vector_store %arg5[%14, %c0_10], %13 {strides = array<i32>} : memref<16x384xf32, #tpu.memory_space<vmem>>, vector<1x384xf32>,
    }
    %c16_i32_1 = arith.constant 16 : i32
    %c0 = arith.constant 0 : index
    %c0_2 = arith.constant 0 : index
    %2 = vector.load %arg5[%c0, %c0_2] : memref<16x384xf32, #tpu.memory_space<vmem>>, vector<16x384xf32>
    %3 = arith.truncf %2 : vector<16x384xf32> to vector<16x384xbf16>
    %c0_3 = arith.constant 0 : index
    %c0_4 = arith.constant 0 : index
    %4 = vector.load %arg2[%c0_3, %c0_4] : memref<384x384xbf16, #tpu.memory_space<vmem>>, vector<384x384xbf16>
    %cst = arith.constant dense<0.000000e+00> : vector<16x384xf32>
    %5 = tpu.matmul %3, %4, %cst {dimension_numbers = #tpu.dot_dimension_numbers<[1], [1], [0], [0], [0, 0, 1, 0], [], []>} : vector<16x384xbf16>, vector<384x384xbf16>, vector<16x384xf32> -> vector<16x384xf32>
    %c0_5 = arith.constant 0 : index
    %c0_6 = arith.constant 0 : index
    %6 = vector.load %arg4[%c0_5, %c0_6] : memref<16x384xf32, #tpu.memory_space<vmem>>, vector<16x384xf32>
    tpu.vector_store %arg4[%c0_5, %c0_6], %5 {strides = array<i32>} : memref<16x384xf32, #tpu.memory_space<vmem>>, vector<16x384xf32>,
    return
  }
  func.func @transform_0(%arg0: i32, %arg1: memref<16xi32, #tpu.memory_space<smem>>) -> (i32, i32) {
    %c0_i32 = arith.constant 0 : i32
    %c0_i32_0 = arith.constant 0 : i32
    %c0_i32_1 = arith.constant 0 : i32
    return %c0_i32, %c0_i32_0 : i32, i32
  }
  func.func @transform_1(%arg0: i32, %arg1: memref<16xi32, #tpu.memory_space<smem>>) -> (i32, i32) {
    %c0_i32 = arith.constant 0 : i32
    %c0_i32_0 = arith.constant 0 : i32
    %c0_i32_1 = arith.constant 0 : i32
    return %c0_i32, %c0_i32_0 : i32, i32
  }
  func.func @transform_2(%arg0: i32, %arg1: memref<16xi32, #tpu.memory_space<smem>>) -> (i32, i32) {
    %c0_i32 = arith.constant 0 : i32
    %c0_i32_0 = arith.constant 0 : i32
    return %arg0, %c0_i32 : i32, i32
  }
}

</mosaic_0001>

<llo_original>
// kernel: forward.1
$region0: #{forward.1}
  #allocation0 [shape = 'u32[]', space=smem, size = 0x4, offset = 0x4, fixed_abs, tag = 'smem constant byte address 0x4 - core index']
  #allocation1 [shape = 'u32[144,128]{1,0:T(1,128)}', space=vmem, size = 0x12000, scoped, tag = 'internal scratch']
  #allocation2 [shape = 'f32[16,384]{1,0:T(8,128)}', space=vmem, size = 0x6000, scoped, tag = 'scratch operand']
  #allocation3 [shape = 's32[16]{0}', space=sflag, size = 0x40, scoped, tag = 'scratch operand']
  #allocation4 [shape = 's32[1]{0}', space=sflag, size = 0x4, scoped, tag = 'scoped memory for forward.1']
  #allocation5 [shape = 'u8[512]{0}', space=smem, size = 0x200, scoped, tag = 'prefetched SMEM operand 0']
  %s0 = inlined_call_operand.vmem [shape: s32[16], index: 0, kind: input, shape index: {}]
  %s1 = inlined_call_operand.vmem [shape: bf16[384,384], index: 1, kind: input, shape index: {}]
  %s2 = inlined_call_operand.vmem [shape: f32[64,384], index: 2, kind: input, shape index: {}]
  %s3 = inlined_call_operand.vmem [shape: f32[16,384], index: 3, kind: output, shape index: {}]
  %s4 = sld [smem:[#allocation0]]
  $region25: #{forward.1} parent=0
    _
  %s6 = ssub.s32 1, %s4
  %s7 = scalar_select 0, %s6, %s4
  %s8 = sshll.u32 %s0, 4
  %s9 = int_to_ptr.vmem [resolvable:$true] %s8
  %11 = dma.vmem_to_smem %s9, 16, [#allocation5], [#allocation4]
  %12 = dma.done [#allocation4], 16
  %13 = sfence
  // Predicated region
  $region2: #{forward.1} parent=0 // pred_check
    _
  $region3: #{forward.1} parent=0 // pred_check_branch
    %15 = sbr.rel (0) target = $region5
  $region4: #{forward.1} parent=0 // pred_region
    _
  $region5: #{forward.1} parent=0 // pred_fallthru
    _
  // Predicated region
  $region6: #{forward.1} parent=0 // pred_check
    _
  $region7: #{forward.1} parent=0 // pred_check_branch
    %17 = sbr.rel (0) target = $region9
  $region8: #{forward.1} parent=0 // pred_region
    _
  $region9: #{forward.1} parent=0 // pred_fallthru
    _
  %s19 = smul.u32 0, 16
  loop: start=0, step=1, limit=16
  $region10: #{forward.1} parent=0 // loop_pre_header
    _
  $region11: #{forward.1} parent=0 // loop_header
    %s21 = sphi 0, %s25
    %p22 = scmp.ge.s32.totalorder %s21, 16
  $region12: #{forward.1} parent=0 // loop_header_branch
    %24 = sbr.rel (%p22) target = $region16
  $region13: #{forward.1} parent=0 // loop_body
    %s26 = sadd.s32 %s19, %s21
    %s27 = sld [smem:[#allocation5 + %s26]]
    %s28 = sshra.s32 %s27, 3
    %s29 = sand.u32 %s27, 7
    %s30 = sshra.s32 %s27, 3
    %s31 = sand.u32 %s27, 7
    %s32 = smul.u32 %s28, 3
    %s33 = smul.u32 %s32, 8
    %s34 = sadd.s32 %s33, %s31
    %s35 = scalar_lea.vmem %s2, %s34
    %v36 = vld [vmem:[%s35] ss:$8 sm:$0x7]
    %v37 = vlaneseq
    %vm38 = vcmp.ge.s32.totalorder %v37, 0
    %vm39 = vcmp.lt.s32.totalorder %v37, 384
    %vm40 = vmand %vm38, %vm39
    %s41 = sshra.s32 %s21, 3
    %s42 = sand.u32 %s21, 7
    %s43 = sshra.s32 %s21, 3
    %s44 = sand.u32 %s21, 7
    %s45 = smul.u32 %s41, 3
    %s46 = smul.u32 %s45, 8
    %s47 = sadd.s32 %s46, %s44
    %s48 = scalar_lea.vmem [#allocation2], %s47
    %49 = vst.msk [vmem:[%s48] ss:$8 sm:$0x7] %vm40, %v36
    %50 = vst.msk [vmem:[%s48] ss:$8 sm:$0x0] %vm40, %v36
  $region14: #{forward.1} parent=0 // loop_footer
    %s25 = sadd.s32 1, %s21
  $region15: #{forward.1} parent=0 // loop_footer_branch
    %20 = sbr.rel target = $region11
  $region16: #{forward.1} parent=0 // loop_exit
    _
  %v51 = vld [vmem:[#allocation2] sm:$0xff]
  %v52 = vld [vmem:[#allocation2 + $0x8] sm:$0xff]
  %v53 = vld [vmem:[#allocation2 + $0x10] sm:$0xff]
  %v54 = vld [vmem:[#allocation2 + $0x18] sm:$0xff]
  %v55 = vld [vmem:[#allocation2 + $0x20] sm:$0xff]
  %v56 = vld [vmem:[#allocation2 + $0x28] sm:$0xff]
  %v57 = vpack.c.bf16 %v54, %v51
  %v58 = vpack.c.bf16 %v55, %v52
  %v59 = vpack.c.bf16 %v56, %v53
  %v60 = vld [vmem:[%s1] sm:$0xff]
  %v61 = vld [vmem:[%s1 + $0x8] sm:$0xf]
  %v62 = vld [vmem:[%s1 + $0xc] sm:$0xff]
  %v63 = vld [vmem:[%s1 + $0x14] sm:$0xf]
  %v64 = vld [vmem:[%s1 + $0x18] sm:$0xff]
  %v65 = vld [vmem:[%s1 + $0x20] sm:$0xf]
  %v66 = vld [vmem:[%s1 + $0x24] sm:$0xff]
  %v67 = vld [vmem:[%s1 + $0x2c] sm:$0xf]
  %v68 = vld [vmem:[%s1 + $0x30] sm:$0xff]
  %v69 = vld [vmem:[%s1 + $0x38] sm:$0xf]
  %v70 = vld [vmem:[%s1 + $0x3c] sm:$0xff]
  %v71 = vld [vmem:[%s1 + $0x44] sm:$0xf]
  %v72 = vld [vmem:[%s1 + $0x48] sm:$0xff]
  %v73 = vld [vmem:[%s1 + $0x50] sm:$0xf]
  %v74 = vld [vmem:[%s1 + $0x54] sm:$0xff]
  %v75 = vld [vmem:[%s1 + $0x5c] sm:$0xf]
  %v76 = vld [vmem:[%s1 + $0x60] sm:$0xff]
  %v77 = vld [vmem:[%s1 + $0x68] sm:$0xf]
  %v78 = vld [vmem:[%s1 + $0x6c] sm:$0xff]
  %v79 = vld [vmem:[%s1 + $0x74] sm:$0xf]
  %v80 = vld [vmem:[%s1 + $0x78] sm:$0xff]
  %v81 = vld [vmem:[%s1 + $0x80] sm:$0xf]
  %v82 = vld [vmem:[%s1 + $0x84] sm:$0xff]
  %v83 = vld [vmem:[%s1 + $0x8c] sm:$0xf]
  %v84 = vld [vmem:[%s1 + $0x90] sm:$0xff]
  %v85 = vld [vmem:[%s1 + $0x98] sm:$0xf]
  %v86 = vld [vmem:[%s1 + $0x9c] sm:$0xff]
  %v87 = vld [vmem:[%s1 + $0xa4] sm:$0xf]
  %v88 = vld [vmem:[%s1 + $0xa8] sm:$0xff]
  %v89 = vld [vmem:[%s1 + $0xb0] sm:$0xf]
  %v90 = vld [vmem:[%s1 + $0xb4] sm:$0xff]
  %v91 = vld [vmem:[%s1 + $0xbc] sm:$0xf]
  %v92 = vld [vmem:[%s1 + $0xc0] sm:$0xff]
  %v93 = vld [vmem:[%s1 + $0xc8] sm:$0xf]
  %v94 = vld [vmem:[%s1 + $0xcc] sm:$0xff]
  %v95 = vld [vmem:[%s1 + $0xd4] sm:$0xf]
  %v96 = vld [vmem:[%s1 + $0xd8] sm:$0xff]
  %v97 = vld [vmem:[%s1 + $0xe0] sm:$0xf]
  %v98 = vld [vmem:[%s1 + $0xe4] sm:$0xff]
  %v99 = vld [vmem:[%s1 + $0xec] sm:$0xf]
  %v100 = vld [vmem:[%s1 + $0xf0] sm:$0xff]
  %v101 = vld [vmem:[%s1 + $0xf8] sm:$0xf]
  %v102 = vld [vmem:[%s1 + $0xfc] sm:$0xff]
  %v103 = vld [vmem:[%s1 + $0x104] sm:$0xf]
  %v104 = vld [vmem:[%s1 + $0x108] sm:$0xff]
  %v105 = vld [vmem:[%s1 + $0x110] sm:$0xf]
  %v106 = vld [vmem:[%s1 + $0x114] sm:$0xff]
  %v107 = vld [vmem:[%s1 + $0x11c] sm:$0xf]
  %v108 = vld [vmem:[%s1 + $0x120] sm:$0xff]
  %v109 = vld [vmem:[%s1 + $0x128] sm:$0xf]
  %v110 = vld [vmem:[%s1 + $0x12c] sm:$0xff]
  %v111 = vld [vmem:[%s1 + $0x134] sm:$0xf]
  %v112 = vld [vmem:[%s1 + $0x138] sm:$0xff]
  %v113 = vld [vmem:[%s1 + $0x140] sm:$0xf]
  %v114 = vld [vmem:[%s1 + $0x144] sm:$0xff]
  %v115 = vld [vmem:[%s1 + $0x14c] sm:$0xf]
  %v116 = vld [vmem:[%s1 + $0x150] sm:$0xff]
  %v117 = vld [vmem:[%s1 + $0x158] sm:$0xf]
  %v118 = vld [vmem:[%s1 + $0x15c] sm:$0xff]
  %v119 = vld [vmem:[%s1 + $0x164] sm:$0xf]
  %v120 = vld [vmem:[%s1 + $0x168] sm:$0xff]
  %v121 = vld [vmem:[%s1 + $0x170] sm:$0xf]
  %v122 = vld [vmem:[%s1 + $0x174] sm:$0xff]
  %v123 = vld [vmem:[%s1 + $0x17c] sm:$0xf]
  %v124 = vld [vmem:[%s1 + $0x180] sm:$0xff]
  %v125 = vld [vmem:[%s1 + $0x188] sm:$0xf]
  %v126 = vld [vmem:[%s1 + $0x18c] sm:$0xff]
  %v127 = vld [vmem:[%s1 + $0x194] sm:$0xf]
  %v128 = vld [vmem:[%s1 + $0x198] sm:$0xff]
  %v129 = vld [vmem:[%s1 + $0x1a0] sm:$0xf]
  %v130 = vld [vmem:[%s1 + $0x1a4] sm:$0xff]
  %v131 = vld [vmem:[%s1 + $0x1ac] sm:$0xf]
  %v132 = vld [vmem:[%s1 + $0x1b0] sm:$0xff]
  %v133 = vld [vmem:[%s1 + $0x1b8] sm:$0xf]
  %v134 = vld [vmem:[%s1 + $0x1bc] sm:$0xff]
  %v135 = vld [vmem:[%s1 + $0x1c4] sm:$0xf]
  %v136 = vld [vmem:[%s1 + $0x1c8] sm:$0xff]
  %v137 = vld [vmem:[%s1 + $0x1d0] sm:$0xf]
  %v138 = vld [vmem:[%s1 + $0x1d4] sm:$0xff]
  %v139 = vld [vmem:[%s1 + $0x1dc] sm:$0xf]
  %v140 = vld [vmem:[%s1 + $0x1e0] sm:$0xff]
  %v141 = vld [vmem:[%s1 + $0x1e8] sm:$0xf]
  %v142 = vld [vmem:[%s1 + $0x1ec] sm:$0xff]
  %v143 = vld [vmem:[%s1 + $0x1f4] sm:$0xf]
  %v144 = vld [vmem:[%s1 + $0x1f8] sm:$0xff]
  %v145 = vld [vmem:[%s1 + $0x200] sm:$0xf]
  %v146 = vld [vmem:[%s1 + $0x204] sm:$0xff]
  %v147 = vld [vmem:[%s1 + $0x20c] sm:$0xf]
  %v148 = vld [vmem:[%s1 + $0x210] sm:$0xff]
  %v149 = vld [vmem:[%s1 + $0x218] sm:$0xf]
  %v150 = vld [vmem:[%s1 + $0x21c] sm:$0xff]
  %v151 = vld [vmem:[%s1 + $0x224] sm:$0xf]
  %v152 = vld [vmem:[%s1 + $0x228] sm:$0xff]
  %v153 = vld [vmem:[%s1 + $0x230] sm:$0xf]
  %v154 = vld [vmem:[%s1 + $0x234] sm:$0xff]
  %v155 = vld [vmem:[%s1 + $0x23c] sm:$0xf]
  %v252 = vunpack.c.l.b16 %v60
  %v253 = vunpack.c.h.b16 %v60
  %v254 = vunpack.c.l.b16 %v61
  %v255 = vunpack.c.l.b16 %v62
  %v256 = vunpack.c.h.b16 %v62
  %v257 = vunpack.c.l.b16 %v63
  %v258 = vunpack.c.l.b16 %v64
  %v259 = vunpack.c.h.b16 %v64
  %v260 = vunpack.c.l.b16 %v65
  %v261 = vunpack.c.l.b16 %v66
  %v262 = vunpack.c.h.b16 %v66
  %v263 = vunpack.c.l.b16 %v67
  %v264 = vunpack.c.l.b16 %v68
  %v265 = vunpack.c.h.b16 %v68
  %v266 = vunpack.c.l.b16 %v69
  %v267 = vunpack.c.l.b16 %v70
  %v268 = vunpack.c.h.b16 %v70
  %v269 = vunpack.c.l.b16 %v71
  %v270 = vunpack.c.l.b16 %v72
  %v271 = vunpack.c.h.b16 %v72
  %v272 = vunpack.c.l.b16 %v73
  %v273 = vunpack.c.l.b16 %v74
  %v274 = vunpack.c.h.b16 %v74
  %v275 = vunpack.c.l.b16 %v75
  %v276 = vunpack.c.l.b16 %v76
  %v277 = vunpack.c.h.b16 %v76
  %v278 = vunpack.c.l.b16 %v77
  %v279 = vunpack.c.l.b16 %v78
  %v280 = vunpack.c.h.b16 %v78
  %v281 = vunpack.c.l.b16 %v79
  %v282 = vunpack.c.l.b16 %v80
  %v283 = vunpack.c.h.b16 %v80
  %v284 = vunpack.c.l.b16 %v81
  %v285 = vunpack.c.l.b16 %v82
  %v286 = vunpack.c.h.b16 %v82
  %v287 = vunpack.c.l.b16 %v83
  %v288 = vunpack.c.l.b16 %v84
  %v289 = vunpack.c.h.b16 %v84
  %v290 = vunpack.c.l.b16 %v85
  %v291 = vunpack.c.l.b16 %v86
  %v292 = vunpack.c.h.b16 %v86
  %v293 = vunpack.c.l.b16 %v87
  %v294 = vunpack.c.l.b16 %v88
  %v295 = vunpack.c.h.b16 %v88
  %v296 = vunpack.c.l.b16 %v89
  %v297 = vunpack.c.l.b16 %v90
  %v298 = vunpack.c.h.b16 %v90
  %v299 = vunpack.c.l.b16 %v91
  %v300 = vunpack.c.l.b16 %v92
  %v301 = vunpack.c.h.b16 %v92
  %v302 = vunpack.c.l.b16 %v93
  %v303 = vunpack.c.l.b16 %v94
  %v304 = vunpack.c.h.b16 %v94
  %v305 = vunpack.c.l.b16 %v95
  %v306 = vunpack.c.l.b16 %v96
  %v307 = vunpack.c.h.b16 %v96
  %v308 = vunpack.c.l.b16 %v97
  %v309 = vunpack.c.l.b16 %v98
  %v310 = vunpack.c.h.b16 %v98
  %v311 = vunpack.c.l.b16 %v99
  %v312 = vunpack.c.l.b16 %v100
  %v313 = vunpack.c.h.b16 %v100
  %v314 = vunpack.c.l.b16 %v101
  %v315 = vunpack.c.l.b16 %v102
  %v316 = vunpack.c.h.b16 %v102
  %v317 = vunpack.c.l.b16 %v103
  %v318 = vunpack.c.l.b16 %v104
  %v319 = vunpack.c.h.b16 %v104
  %v320 = vunpack.c.l.b16 %v105
  %v321 = vunpack.c.l.b16 %v106
  %v322 = vunpack.c.h.b16 %v106
  %v323 = vunpack.c.l.b16 %v107
  %v324 = vunpack.c.l.b16 %v108
  %v325 = vunpack.c.h.b16 %v108
  %v326 = vunpack.c.l.b16 %v109
  %v327 = vunpack.c.l.b16 %v110
  %v328 = vunpack.c.h.b16 %v110
  %v329 = vunpack.c.l.b16 %v111
  %v330 = vunpack.c.l.b16 %v112
  %v331 = vunpack.c.h.b16 %v112
  %v332 = vunpack.c.l.b16 %v113
  %v333 = vunpack.c.l.b16 %v114
  %v334 = vunpack.c.h.b16 %v114
  %v335 = vunpack.c.l.b16 %v115
  %v336 = vunpack.c.l.b16 %v116
  %v337 = vunpack.c.h.b16 %v116
  %v338 = vunpack.c.l.b16 %v117
  %v339 = vunpack.c.l.b16 %v118
  %v340 = vunpack.c.h.b16 %v118
  %v341 = vunpack.c.l.b16 %v119
  %v342 = vunpack.c.l.b16 %v120
  %v343 = vunpack.c.h.b16 %v120
  %v344 = vunpack.c.l.b16 %v121
  %v345 = vunpack.c.l.b16 %v122
  %v346 = vunpack.c.h.b16 %v122
  %v347 = vunpack.c.l.b16 %v123
  %v348 = vunpack.c.l.b16 %v124
  %v349 = vunpack.c.h.b16 %v124
  %v350 = vunpack.c.l.b16 %v125
  %v351 = vunpack.c.l.b16 %v126
  %v352 = vunpack.c.h.b16 %v126
  %v353 = vunpack.c.l.b16 %v127
  %v354 = vunpack.c.l.b16 %v128
  %v355 = vunpack.c.h.b16 %v128
  %v356 = vunpack.c.l.b16 %v129
  %v357 = vunpack.c.l.b16 %v130
  %v358 = vunpack.c.h.b16 %v130
  %v359 = vunpack.c.l.b16 %v131
  %v360 = vunpack.c.l.b16 %v132
  %v361 = vunpack.c.h.b16 %v132
  %v362 = vunpack.c.l.b16 %v133
  %v363 = vunpack.c.l.b16 %v134
  %v364 = vunpack.c.h.b16 %v134
  %v365 = vunpack.c.l.b16 %v135
  %v366 = vunpack.c.l.b16 %v136
  %v367 = vunpack.c.h.b16 %v136
  %v368 = vunpack.c.l.b16 %v137
  %v369 = vunpack.c.l.b16 %v138
  %v370 = vunpack.c.h.b16 %v138
  %v371 = vunpack.c.l.b16 %v139
  %v372 = vunpack.c.l.b16 %v140
  %v373 = vunpack.c.h.b16 %v140
  %v374 = vunpack.c.l.b16 %v141
  %v375 = vunpack.c.l.b16 %v142
  %v376 = vunpack.c.h.b16 %v142
  %v377 = vunpack.c.l.b16 %v143
  %v378 = vunpack.c.l.b16 %v144
  %v379 = vunpack.c.h.b16 %v144
  %v380 = vunpack.c.l.b16 %v145
  %v381 = vunpack.c.l.b16 %v146
  %v382 = vunpack.c.h.b16 %v146
  %v383 = vunpack.c.l.b16 %v147
  %v384 = vunpack.c.l.b16 %v148
  %v385 = vunpack.c.h.b16 %v148
  %v386 = vunpack.c.l.b16 %v149
  %v387 = vunpack.c.l.b16 %v150
  %v388 = vunpack.c.h.b16 %v150
  %v389 = vunpack.c.l.b16 %v151
  %v390 = vunpack.c.l.b16 %v152
  %v391 = vunpack.c.h.b16 %v152
  %v392 = vunpack.c.l.b16 %v153
  %v393 = vunpack.c.l.b16 %v154
  %v394 = vunpack.c.h.b16 %v154
  %v395 = vunpack.c.l.b16 %v155
  %v396 = vpack.c.b16 %v255, %v252
  %v397 = vpack.c.b16 %v256, %v253
  %v398 = vpack.c.b16 %v257, %v254
  %v399 = vpack.c.b16 %v261, %v258
  %v400 = vpack.c.b16 %v262, %v259
  %v401 = vpack.c.b16 %v263, %v260
  %v402 = vpack.c.b16 %v267, %v264
  %v403 = vpack.c.b16 %v268, %v265
  %v404 = vpack.c.b16 %v269, %v266
  %v405 = vpack.c.b16 %v273, %v270
  %v406 = vpack.c.b16 %v274, %v271
  %v407 = vpack.c.b16 %v275, %v272
  %v408 = vpack.c.b16 %v279, %v276
  %v409 = vpack.c.b16 %v280, %v277
  %v410 = vpack.c.b16 %v281, %v278
  %v411 = vpack.c.b16 %v285, %v282
  %v412 = vpack.c.b16 %v286, %v283
  %v413 = vpack.c.b16 %v287, %v284
  %v414 = vpack.c.b16 %v291, %v288
  %v415 = vpack.c.b16 %v292, %v289
  %v416 = vpack.c.b16 %v293, %v290
  %v417 = vpack.c.b16 %v297, %v294
  %v418 = vpack.c.b16 %v298, %v295
  %v419 = vpack.c.b16 %v299, %v296
  %v420 = vpack.c.b16 %v303, %v300
  %v421 = vpack.c.b16 %v304, %v301
  %v422 = vpack.c.b16 %v305, %v302
  %v423 = vpack.c.b16 %v309, %v306
  %v424 = vpack.c.b16 %v310, %v307
  %v425 = vpack.c.b16 %v311, %v308
  %v426 = vpack.c.b16 %v315, %v312
  %v427 = vpack.c.b16 %v316, %v313
  %v428 = vpack.c.b16 %v317, %v314
  %v429 = vpack.c.b16 %v321, %v318
  %v430 = vpack.c.b16 %v322, %v319
  %v431 = vpack.c.b16 %v323, %v320
  %v432 = vpack.c.b16 %v327, %v324
  %v433 = vpack.c.b16 %v328, %v325
  %v434 = vpack.c.b16 %v329, %v326
  %v435 = vpack.c.b16 %v333, %v330
  %v436 = vpack.c.b16 %v334, %v331
  %v437 = vpack.c.b16 %v335, %v332
  %v438 = vpack.c.b16 %v339, %v336
  %v439 = vpack.c.b16 %v340, %v337
  %v440 = vpack.c.b16 %v341, %v338
  %v441 = vpack.c.b16 %v345, %v342
  %v442 = vpack.c.b16 %v346, %v343
  %v443 = vpack.c.b16 %v347, %v344
  %v444 = vpack.c.b16 %v351, %v348
  %v445 = vpack.c.b16 %v352, %v349
  %v446 = vpack.c.b16 %v353, %v350
  %v447 = vpack.c.b16 %v357, %v354
  %v448 = vpack.c.b16 %v358, %v355
  %v449 = vpack.c.b16 %v359, %v356
  %v450 = vpack.c.b16 %v363, %v360
  %v451 = vpack.c.b16 %v364, %v361
  %v452 = vpack.c.b16 %v365, %v362
  %v453 = vpack.c.b16 %v369, %v366
  %v454 = vpack.c.b16 %v370, %v367
  %v455 = vpack.c.b16 %v371, %v368
  %v456 = vpack.c.b16 %v375, %v372
  %v457 = vpack.c.b16 %v376, %v373
  %v458 = vpack.c.b16 %v377, %v374
  %v459 = vpack.c.b16 %v381, %v378
  %v460 = vpack.c.b16 %v382, %v379
  %v461 = vpack.c.b16 %v383, %v380
  %v462 = vpack.c.b16 %v387, %v384
  %v463 = vpack.c.b16 %v388, %v385
  %v464 = vpack.c.b16 %v389, %v386
  %v465 = vpack.c.b16 %v393, %v390
  %v466 = vpack.c.b16 %v394, %v391
  %v467 = vpack.c.b16 %v395, %v392
  %540 = vmatprep.subr.bf16.mxu0 %v397
  %541 = vmatpush1.bf16.xpose.msra.mxu0 %v396
  %542 = vmatprep.subr.bf16.mxu0 %v400
  %543 = vmatpush1.bf16.xpose.msra.mxu0 %v399
  %544 = vmatprep.subr.bf16.mxu0 %v403
  %545 = vmatpush1.bf16.xpose.msra.mxu0 %v402
  %546 = vmatprep.subr.bf16.mxu0 %v406
  %547 = vmatpush1.bf16.xpose.msra.mxu0 %v405
  %548 = vmatprep.subr.bf16.mxu0 %v409
  %549 = vmatpush1.bf16.xpose.msra.mxu0 %v408
  %550 = vmatprep.subr.bf16.mxu0 %v412
  %551 = vmatpush1.bf16.xpose.msra.mxu0 %v411
  %552 = vmatprep.subr.bf16.mxu0 %v415
  %553 = vmatpush1.bf16.xpose.msra.mxu0 %v414
  %554 = vmatprep.subr.bf16.mxu0 %v418
  %555 = vmatpush1.bf16.xpose.msra.mxu0 %v417
  %556 = vmatprep.subr.bf16.mxu0 %v421
  %557 = vmatpush1.bf16.xpose.msra.mxu0 %v420
  %558 = vmatprep.subr.bf16.mxu0 %v424
  %559 = vmatpush1.bf16.xpose.msra.mxu0 %v423
  %560 = vmatprep.subr.bf16.mxu0 %v427
  %561 = vmatpush1.bf16.xpose.msra.mxu0 %v426
  %562 = vmatprep.subr.bf16.mxu0 %v430
  %563 = vmatpush1.bf16.xpose.msra.mxu0 %v429
  %564 = vmatprep.subr.bf16.mxu0 %v433
  %565 = vmatpush1.bf16.xpose.msra.mxu0 %v432
  %566 = vmatprep.subr.bf16.mxu0 %v436
  %567 = vmatpush1.bf16.xpose.msra.mxu0 %v435
  %568 = vmatprep.subr.bf16.mxu0 %v439
  %569 = vmatpush1.bf16.xpose.msra.mxu0 %v438
  %570 = vmatprep.subr.bf16.mxu0 %v442
  %571 = vmatpush1.bf16.xpose.msra.mxu0 %v441
  %572 = vmatprep.mubr.bf16.mxu0 %v58
  %573 = vmatmul.mubr.bf16.gmra.mrb[0].mxu0 %v57
  %v574 = vpop.f32.mrb[0].mxu0
  %v575 = vadd.f32 0.0, %v574
  %v576 = vpop.f32.mrb[0].mxu0
  %v577 = vadd.f32 0.0, %v576
  %v578 = vpop.f32.mrb[0].mxu0
  %v579 = vadd.f32 0.0, %v578
  %v580 = vpop.f32.mrb[0].mxu0
  %v581 = vadd.f32 0.0, %v580
  %582 = vdwg.mxu0
  %583 = vmatprep.subr.bf16.mxu0 0
  %584 = vmatpush1.bf16.xpose.msra.mxu0 %v398
  %585 = vmatprep.subr.bf16.mxu0 0
  %586 = vmatpush1.bf16.xpose.msra.mxu0 %v401
  %587 = vmatprep.subr.bf16.mxu0 0
  %588 = vmatpush1.bf16.xpose.msra.mxu0 %v404
  %589 = vmatprep.subr.bf16.mxu0 0
  %590 = vmatpush1.bf16.xpose.msra.mxu0 %v407
  %591 = vmatprep.subr.bf16.mxu0 0
  %592 = vmatpush1.bf16.xpose.msra.mxu0 %v410
  %593 = vmatprep.subr.bf16.mxu0 0
  %594 = vmatpush1.bf16.xpose.msra.mxu0 %v413
  %595 = vmatprep.subr.bf16.mxu0 0
  %596 = vmatpush1.bf16.xpose.msra.mxu0 %v416
  %597 = vmatprep.subr.bf16.mxu0 0
  %598 = vmatpush1.bf16.xpose.msra.mxu0 %v419
  %599 = vmatprep.subr.bf16.mxu0 0
  %600 = vmatpush1.bf16.xpose.msra.mxu0 %v422
  %601 = vmatprep.subr.bf16.mxu0 0
  %602 = vmatpush1.bf16.xpose.msra.mxu0 %v425
  %603 = vmatprep.subr.bf16.mxu0 0
  %604 = vmatpush1.bf16.xpose.msra.mxu0 %v428
  %605 = vmatprep.subr.bf16.mxu0 0
  %606 = vmatpush1.bf16.xpose.msra.mxu0 %v431
  %607 = vmatprep.subr.bf16.mxu0 0
  %608 = vmatpush1.bf16.xpose.msra.mxu0 %v434
  %609 = vmatprep.subr.bf16.mxu0 0
  %610 = vmatpush1.bf16.xpose.msra.mxu0 %v437
  %611 = vmatprep.subr.bf16.mxu0 0
  %612 = vmatpush1.bf16.xpose.msra.mxu0 %v440
  %613 = vmatprep.subr.bf16.mxu0 0
  %614 = vmatpush1.bf16.xpose.msra.mxu0 %v443
  %615 = vmatprep.mubr.bf16.mxu0 0
  %616 = vmatmul.mubr.bf16.gmra.mrb[0].mxu0 %v59
  %v617 = vpop.f32.mrb[0].mxu0
  %v618 = vadd.f32 %v575, %v617
  %v619 = vpop.f32.mrb[0].mxu0
  %v620 = vadd.f32 %v577, %v619
  %v621 = vpop.f32.mrb[0].mxu0
  %v622 = vadd.f32 %v579, %v621
  %v623 = vpop.f32.mrb[0].mxu0
  %v624 = vadd.f32 %v581, %v623
  %625 = vdwg.mxu0
  %626 = vmatprep.subr.bf16.mxu0 %v445
  %627 = vmatpush1.bf16.xpose.msra.mxu0 %v444
  %628 = vmatprep.subr.bf16.mxu0 %v448
  %629 = vmatpush1.bf16.xpose.msra.mxu0 %v447
  %630 = vmatprep.subr.bf16.mxu0 %v451
  %631 = vmatpush1.bf16.xpose.msra.mxu0 %v450
  %632 = vmatprep.subr.bf16.mxu0 %v454
  %633 = vmatpush1.bf16.xpose.msra.mxu0 %v453
  %634 = vmatprep.subr.bf16.mxu0 %v457
  %635 = vmatpush1.bf16.xpose.msra.mxu0 %v456
  %636 = vmatprep.subr.bf16.mxu0 %v460
  %637 = vmatpush1.bf16.xpose.msra.mxu0 %v459
  %638 = vmatprep.subr.bf16.mxu0 %v463
  %639 = vmatpush1.bf16.xpose.msra.mxu0 %v462
  %640 = vmatprep.subr.bf16.mxu0 %v466
  %641 = vmatpush1.bf16.xpose.msra.mxu0 %v465
  %642 = vmatprep.subr.bf16.mxu0 0
  %643 = vmatpush1.bf16.xpose.msra.mxu0 0
  %644 = vmatprep.subr.bf16.mxu0 0
  %645 = vmatpush1.bf16.xpose.msra.mxu0 0
  %646 = vmatprep.subr.bf16.mxu0 0
  %647 = vmatpush1.bf16.xpose.msra.mxu0 0
  %648 = vmatprep.subr.bf16.mxu0 0
  %649 = vmatpush1.bf16.xpose.msra.mxu0 0
  %650 = vmatprep.subr.bf16.mxu0 0
  %651 = vmatpush1.bf16.xpose.msra.mxu0 0
  %652 = vmatprep.subr.bf16.mxu0 0
  %653 = vmatpush1.bf16.xpose.msra.mxu0 0
  %654 = vmatprep.subr.bf16.mxu0 0
  %655 = vmatpush1.bf16.xpose.msra.mxu0 0
  %656 = vmatprep.subr.bf16.mxu0 0
  %657 = vmatpush1.bf16.xpose.msra.mxu0 0
  %658 = vmatprep.mubr.bf16.mxu0 %v58
  %659 = vmatmul.mubr.bf16.gmra.mrb[0].mxu0 %v57
  %v660 = vpop.f32.mrb[0].mxu0
  %v661 = vadd.f32 0.0, %v660
  %v662 = vpop.f32.mrb[0].mxu0
  %v663 = vpop.f32.mrb[0].mxu0
  %v664 = vadd.f32 0.0, %v663
  %v665 = vpop.f32.mrb[0].mxu0
  %666 = vdwg.mxu0
  %667 = vmatprep.subr.bf16.mxu0 0
  %668 = vmatpush1.bf16.xpose.msra.mxu0 %v446
  %669 = vmatprep.subr.bf16.mxu0 0
  %670 = vmatpush1.bf16.xpose.msra.mxu0 %v449
  %671 = vmatprep.subr.bf16.mxu0 0
  %672 = vmatpush1.bf16.xpose.msra.mxu0 %v452
  %673 = vmatprep.subr.bf16.mxu0 0
  %674 = vmatpush1.bf16.xpose.msra.mxu0 %v455
  %675 = vmatprep.subr.bf16.mxu0 0
  %676 = vmatpush1.bf16.xpose.msra.mxu0 %v458
  %677 = vmatprep.subr.bf16.mxu0 0
  %678 = vmatpush1.bf16.xpose.msra.mxu0 %v461
  %679 = vmatprep.subr.bf16.mxu0 0
  %680 = vmatpush1.bf16.xpose.msra.mxu0 %v464
  %681 = vmatprep.subr.bf16.mxu0 0
  %682 = vmatpush1.bf16.xpose.msra.mxu0 %v467
  %683 = vmatprep.subr.bf16.mxu0 0
  %684 = vmatpush1.bf16.xpose.msra.mxu0 0
  %685 = vmatprep.subr.bf16.mxu0 0
  %686 = vmatpush1.bf16.xpose.msra.mxu0 0
  %687 = vmatprep.subr.bf16.mxu0 0
  %688 = vmatpush1.bf16.xpose.msra.mxu0 0
  %689 = vmatprep.subr.bf16.mxu0 0
  %690 = vmatpush1.bf16.xpose.msra.mxu0 0
  %691 = vmatprep.subr.bf16.mxu0 0
  %692 = vmatpush1.bf16.xpose.msra.mxu0 0
  %693 = vmatprep.subr.bf16.mxu0 0
  %694 = vmatpush1.bf16.xpose.msra.mxu0 0
  %695 = vmatprep.subr.bf16.mxu0 0
  %696 = vmatpush1.bf16.xpose.msra.mxu0 0
  %697 = vmatprep.subr.bf16.mxu0 0
  %698 = vmatpush1.bf16.xpose.msra.mxu0 0
  %699 = vmatprep.mubr.bf16.mxu0 0
  %700 = vmatmul.mubr.bf16.gmra.mrb[0].mxu0 %v59
  %v701 = vpop.f32.mrb[0].mxu0
  %v702 = vadd.f32 %v661, %v701
  %v703 = vpop.f32.mrb[0].mxu0
  %v704 = vpop.f32.mrb[0].mxu0
  %v705 = vadd.f32 %v664, %v704
  %v706 = vpop.f32.mrb[0].mxu0
  %707 = vdwg.mxu0
  %708 = vst [vmem:[%s3] sm:$0xff] %v618
  %709 = vst [vmem:[%s3 + $0x8] sm:$0xff] %v620
  %710 = vst [vmem:[%s3 + $0x10] sm:$0xff] %v702
  %711 = vst [vmem:[%s3 + $0x18] sm:$0xff] %v622
  %712 = vst [vmem:[%s3 + $0x20] sm:$0xff] %v624
  %713 = vst [vmem:[%s3 + $0x28] sm:$0xff] %v705
  // Predicated region
  $region17: #{forward.1} parent=0 // pred_check
    _
  $region18: #{forward.1} parent=0 // pred_check_branch
    %715 = sbr.rel (0) target = $region20
  $region19: #{forward.1} parent=0 // pred_region
    _
  $region20: #{forward.1} parent=0 // pred_fallthru
    _
  // Predicated region
  $region21: #{forward.1} parent=0 // pred_check
    _
  $region22: #{forward.1} parent=0 // pred_check_branch
    %717 = sbr.rel (0) target = $region24
  $region23: #{forward.1} parent=0 // pred_region
    _
  $region24: #{forward.1} parent=0 // pred_fallthru
    _
  %718 = vsyncmov [#allocation3]
  %s719 = vpop.sfrf %718
  %p720 = scmp.eq.s32.totalorder %s719, 0
  %p721 = pneg %p720
  %723 = shalt.err (%p721)
  %s724 = scalar_lea.sflag [#allocation3], 1
  %725 = vsyncmov %s724
  %s726 = vpop.sfrf %725
  %p727 = scmp.eq.s32.totalorder %s726, 0
  %p728 = pneg %p727
  %730 = shalt.err (%p728)
  %s731 = scalar_lea.sflag [#allocation3], 2
  %732 = vsyncmov %s731
  %s733 = vpop.sfrf %732
  %p734 = scmp.eq.s32.totalorder %s733, 0
  %p735 = pneg %p734
  %737 = shalt.err (%p735)
  %s738 = scalar_lea.sflag [#allocation3], 3
  %739 = vsyncmov %s738
  %s740 = vpop.sfrf %739
  %p741 = scmp.eq.s32.totalorder %s740, 0
  %p742 = pneg %p741
  %744 = shalt.err (%p742)
  %s745 = scalar_lea.sflag [#allocation3], 4
  %746 = vsyncmov %s745
  %s747 = vpop.sfrf %746
  %p748 = scmp.eq.s32.totalorder %s747, 0
  %p749 = pneg %p748
  %751 = shalt.err (%p749)
  %s752 = scalar_lea.sflag [#allocation3], 5
  %753 = vsyncmov %s752
  %s754 = vpop.sfrf %753
  %p755 = scmp.eq.s32.totalorder %s754, 0
  %p756 = pneg %p755
  %758 = shalt.err (%p756)
  %s759 = scalar_lea.sflag [#allocation3], 6
  %760 = vsyncmov %s759
  %s761 = vpop.sfrf %760
  %p762 = scmp.eq.s32.totalorder %s761, 0
  %p763 = pneg %p762
  %765 = shalt.err (%p763)
  %s766 = scalar_lea.sflag [#allocation3], 7
  %767 = vsyncmov %s766
  %s768 = vpop.sfrf %767
  %p769 = scmp.eq.s32.totalorder %s768, 0
  %p770 = pneg %p769
  %772 = shalt.err (%p770)
  %s773 = scalar_lea.sflag [#allocation3], 8
  %774 = vsyncmov %s773
  %s775 = vpop.sfrf %774
  %p776 = scmp.eq.s32.totalorder %s775, 0
  %p777 = pneg %p776
  %779 = shalt.err (%p777)
  %s780 = scalar_lea.sflag [#allocation3], 9
  %781 = vsyncmov %s780
  %s782 = vpop.sfrf %781
  %p783 = scmp.eq.s32.totalorder %s782, 0
  %p784 = pneg %p783
  %786 = shalt.err (%p784)
  %s787 = scalar_lea.sflag [#allocation3], 10
  %788 = vsyncmov %s787
  %s789 = vpop.sfrf %788
  %p790 = scmp.eq.s32.totalorder %s789, 0
  %p791 = pneg %p790
  %793 = shalt.err (%p791)
  %s794 = scalar_lea.sflag [#allocation3], 11
  %795 = vsyncmov %s794
  %s796 = vpop.sfrf %795
  %p797 = scmp.eq.s32.totalorder %s796, 0
  %p798 = pneg %p797
  %800 = shalt.err (%p798)
  %s801 = scalar_lea.sflag [#allocation3], 12
  %802 = vsyncmov %s801
  %s803 = vpop.sfrf %802
  %p804 = scmp.eq.s32.totalorder %s803, 0
  %p805 = pneg %p804
  %807 = shalt.err (%p805)
  %s808 = scalar_lea.sflag [#allocation3], 13
  %809 = vsyncmov %s808
  %s810 = vpop.sfrf %809
  %p811 = scmp.eq.s32.totalorder %s810, 0
  %p812 = pneg %p811
  %814 = shalt.err (%p812)
  %s815 = scalar_lea.sflag [#allocation3], 14
  %816 = vsyncmov %s815
  %s817 = vpop.sfrf %816
  %p818 = scmp.eq.s32.totalorder %s817, 0
  %p819 = pneg %p818
  %821 = shalt.err (%p819)
  %s822 = scalar_lea.sflag [#allocation3], 15
  %823 = vsyncmov %s822
  %s824 = vpop.sfrf %823
  %p825 = scmp.eq.s32.totalorder %s824, 0
  %p826 = pneg %p825
  %828 = shalt.err (%p826)

</llo_original>
